<compile_context>
chip_gen: v5e
topology: v5e:2x2
jax: 0.10.0
libtpu: 0.0.40
codegen_flags: <defaults>
</compile_context>

<pallas_src>
import functools

import jax
import jax.numpy as jnp
from jax.experimental import pallas as pl
from jax.experimental.pallas import tpu as pltpu

EPS = 1e-5


# ---------------------------------------------------------------------------
# In-kernel helpers (all LayerNorm / gate math in f32).
# ---------------------------------------------------------------------------
def _layernorm(v, gamma, beta):
    # One-pass variance: the mean and mean-of-squares reductions are
    # independent (the two XLU chains overlap). Clamp against f32 cancellation.
    mean = jnp.mean(v, axis=-1, keepdims=True)
    meansq = jnp.mean(v * v, axis=-1, keepdims=True)
    var = jnp.maximum(meansq - mean * mean, 0.0)
    return (v - mean) * jax.lax.rsqrt(var + EPS) * gamma + beta


def _gate_activations(gates, H):
    if H % 128 == 0:
        # Lane-aligned gate quarters: slice per gate so the EUP sees exactly
        # one transcendental per element (3x sigmoid quarters, 1x tanh).
        ingate = jax.nn.sigmoid(gates[:, 0:H])
        forgetgate = jax.nn.sigmoid(gates[:, H:2 * H])
        cellgate = jnp.tanh(gates[:, 2 * H:3 * H])
        outgate = jax.nn.sigmoid(gates[:, 3 * H:4 * H])
        return ingate, forgetgate, cellgate, outgate
    # H < 128: quarter boundaries fall inside a vreg -> one full-width sigmoid
    # and one full-width tanh, cellgate lanes selected by an iota mask.
    lane = jax.lax.broadcasted_iota(jnp.int32, gates.shape, 1)
    is_cell = jnp.logical_and(lane >= 2 * H, lane < 3 * H)
    acts = jnp.where(is_cell, jnp.tanh(gates), jax.nn.sigmoid(gates))
    return acts[:, 0:H], acts[:, H:2 * H], acts[:, 2 * H:3 * H], acts[:, 3 * H:4 * H]


def _recurrent_step(ig_ln, h, c, whh_t, gh, bh, gc, bc, H, mxu_dtype):
    """One LSTM step given the already-normalized input gates ig_ln (B, 4H)."""
    hg_raw = jnp.dot(h.astype(mxu_dtype), whh_t,
                     preferred_element_type=jnp.float32)
    gates = ig_ln + _layernorm(hg_raw, gh, bh)
    ingate, forgetgate, cellgate, outgate = _gate_activations(gates, H)
    c1 = _layernorm(forgetgate * c + ingate * cellgate, gc, bc)
    h1 = outgate * jnp.tanh(c1)
    return h1, c1


# ---------------------------------------------------------------------------
# Single-step cell kernel (matches the PyTorch module forward exactly).
# ---------------------------------------------------------------------------
def lnlstm_cell_kernel(x_ref, h0_ref, c0_ref, wih_t_ref, whh_t_ref,
                       gi_ref, bi_ref, gh_ref, bh_ref, gc_ref, bc_ref,
                       hc_ref, *, hidden, mxu_dtype):
    H = hidden
    # NOTE: the two matmuls cannot be fused into a single [x, h0] dot because
    # layernorm_i / layernorm_h normalize each product separately before the
    # sum (a fused dot would change semantics).
    ig_raw = jnp.dot(x_ref[...].astype(mxu_dtype), wih_t_ref[...],
                     preferred_element_type=jnp.float32)
    ig_ln = _layernorm(ig_raw, gi_ref[...], bi_ref[...])
    h1, c1 = _recurrent_step(ig_ln,
                             h0_ref[...].astype(jnp.float32),
                             c0_ref[...].astype(jnp.float32),
                             whh_t_ref[...], gh_ref[...], bh_ref[...],
                             gc_ref[...], bc_ref[...], H, mxu_dtype)
    # Two direct slice stores (no concatenate copy before the store).
    hc_ref[:, 0:H] = h1.astype(hc_ref.dtype)
    hc_ref[:, H:2 * H] = c1.astype(hc_ref.dtype)


def layernorm_lstm_cell(x, state, w_ih, w_hh,
                        gamma_i, beta_i, gamma_h, beta_h, gamma_c, beta_c,
                        *, mxu_dtype=jnp.bfloat16, batch_block=None):
    """One LayerNormLSTMCell step: returns (h1, (h1, c1)) like the torch module."""
    h0, c0 = state
    B, I = x.shape
    H = h0.shape[1]
    G = 4 * H
    if batch_block is None:
        batch_block = B
    nb = pl.cdiv(B, batch_block)

    # One-time wrapper-side weight layout + cast (amortized; avoids per-step
    # VPU casts and any hidden in-kernel XLU transpose).
    wih_t = w_ih.T.astype(mxu_dtype)                     # (I, 4H)
    whh_t = w_hh.T.astype(mxu_dtype)                     # (H, 4H)
    gi = gamma_i.reshape(1, G).astype(jnp.float32)
    bi = beta_i.reshape(1, G).astype(jnp.float32)
    gh = gamma_h.reshape(1, G).astype(jnp.float32)
    bh = beta_h.reshape(1, G).astype(jnp.float32)
    gc = gamma_c.reshape(1, H).astype(jnp.float32)
    bc = beta_c.reshape(1, H).astype(jnp.float32)

    const = lambda shape: pl.BlockSpec(shape, lambda b: (0,) * len(shape))
    batched = lambda shape: pl.BlockSpec(
        shape, lambda b: (b,) + (0,) * (len(shape) - 1))

    itemsize = x.dtype.itemsize
    w_bytes = (wih_t.size * wih_t.dtype.itemsize
               + whh_t.size * whh_t.dtype.itemsize)
    param_bytes = (gi.size + bi.size + gh.size + bh.size + gc.size + bc.size) * 4
    act_bytes = batch_block * (I + 4 * H) * itemsize
    vmem_limit = int(min(64 << 20, max(16 << 20,
                                       4 * (w_bytes + param_bytes + act_bytes))))

    cost = pl.CostEstimate(
        flops=2 * B * (I + H) * G,
        transcendentals=B * (2 * G + H + 3),
        bytes_accessed=w_bytes + param_bytes
                       + (x.size + 2 * B * H + B * 2 * H) * itemsize)

    hc = pl.pallas_call(
        functools.partial(lnlstm_cell_kernel, hidden=H, mxu_dtype=mxu_dtype),
        out_shape=jax.ShapeDtypeStruct((B, 2 * H), x.dtype),
        grid=(nb,),
        in_specs=[batched((batch_block, I)),
                  batched((batch_block, H)),
                  batched((batch_block, H)),
                  const((I, G)), const((H, G)),
                  const((1, G)), const((1, G)),
                  const((1, G)), const((1, G)),
                  const((1, H)), const((1, H))],
        out_specs=batched((batch_block, 2 * H)),
        compiler_params=pltpu.CompilerParams(
            dimension_semantics=("parallel",),        # batch axis -> megacore
            vmem_limit_bytes=vmem_limit),
        cost_estimate=cost,
    )(x, h0, c0, wih_t, whh_t, gi, bi, gh, bh, gc, bc)

    h1 = hc[:, :H]
    c1 = hc[:, H:]
    return h1, (h1, c1)


# ---------------------------------------------------------------------------
# Weight-stationary, time-blocked sequence kernel.
# Grid = (batch_blocks [parallel], time_blocks [arbitrary]); weights loaded
# once per batch block; h/c carried in VMEM scratch across time blocks.
# ---------------------------------------------------------------------------
def lnlstm_seq_kernel(xs_ref, h0_ref, c0_ref, wih_t_ref, whh_t_ref,
                      gi_ref, bi_ref, gh_ref, bh_ref, gc_ref, bc_ref,
                      hseq_ref, clast_ref, h_scr, c_scr, *, hidden, mxu_dtype):
    H = hidden
    Tb, Bb, I = xs_ref.shape
    tblk = pl.program_id(1)

    @pl.when(tblk == 0)
    def _():
        h_scr[...] = h0_ref[...].astype(jnp.float32)
        c_scr[...] = c0_ref[...].astype(jnp.float32)

    # Hoisted input projection + layernorm_i for the WHOLE time block:
    # one (Tb*Bb, I) @ (I, 4H) matmul instead of Tb tiny per-step matmuls.
    x_blk = xs_ref[...].reshape(Tb * Bb, I).astype(mxu_dtype)
    ig_raw = jnp.dot(x_blk, wih_t_ref[...], preferred_element_type=jnp.float32)
    ig_ln = _layernorm(ig_raw, gi_ref[...], bi_ref[...])        # (Tb*Bb, 4H)

    whh_t = whh_t_ref[...]
    gh = gh_ref[...]
    bh = bh_ref[...]
    gc = gc_ref[...]
    bc = bc_ref[...]

    h = h_scr[...]
    c = c_scr[...]
    # Fully-unrolled static inner time loop (equivalent to
    # lax.fori_loop(..., unroll=True)); only the recurrent matmul and gate
    # math are on the serial dependence chain.
    for t in range(Tb):
        h, c = _recurrent_step(ig_ln[t * Bb:(t + 1) * Bb, :], h, c,
                               whh_t, gh, bh, gc, bc, H, mxu_dtype)
        hseq_ref[t] = h.astype(hseq_ref.dtype)

    h_scr[...] = h
    c_scr[...] = c

    @pl.when(tblk == pl.num_programs(1) - 1)
    def _():
        clast_ref[...] = c.astype(clast_ref.dtype)


def layernorm_lstm_sequence(xs, state, w_ih, w_hh,
                            gamma_i, beta_i, gamma_h, beta_h, gamma_c, beta_c,
                            *, mxu_dtype=jnp.bfloat16, time_block=8,
                            batch_block=None):
    """Run the cell over xs of shape (T, B, I). Returns (h_seq, (h_T, c_T))."""
    h0, c0 = state
    T, B, I = xs.shape
    H = h0.shape[1]
    G = 4 * H
    if batch_block is None:
        batch_block = B
    nb = pl.cdiv(B, batch_block)
    # Largest divisor of T not exceeding the requested time block.
    Tb = max(d for d in range(1, min(time_block, T) + 1) if T % d == 0)
    nt = T // Tb

    wih_t = w_ih.T.astype(mxu_dtype)                     # (I, 4H)
    whh_t = w_hh.T.astype(mxu_dtype)                     # (H, 4H)
    gi = gamma_i.reshape(1, G).astype(jnp.float32)
    bi = beta_i.reshape(1, G).astype(jnp.float32)
    gh = gamma_h.reshape(1, G).astype(jnp.float32)
    bh = beta_h.reshape(1, G).astype(jnp.float32)
    gc = gamma_c.reshape(1, H).astype(jnp.float32)
    bc = beta_c.reshape(1, H).astype(jnp.float32)

    const = lambda shape: pl.BlockSpec(shape, lambda b, t: (0,) * len(shape))

    itemsize = xs.dtype.itemsize
    w_bytes = (wih_t.size * wih_t.dtype.itemsize
               + whh_t.size * whh_t.dtype.itemsize)
    param_bytes = (gi.size + bi.size + gh.size + bh.size + gc.size + bc.size) * 4
    blk_bytes = Tb * batch_block * (I + H) * itemsize \
        + Tb * batch_block * G * 4 + 4 * batch_block * H * 4
    vmem_limit = int(min(64 << 20, max(16 << 20,
                                       4 * (w_bytes + param_bytes + blk_bytes))))

    cost = pl.CostEstimate(
        flops=2 * T * B * (I + H) * G,
        transcendentals=T * B * (2 * G + H + 3),
        bytes_accessed=w_bytes + param_bytes
                       + (xs.size + 2 * B * H) * itemsize
                       + (T * B * H + B * H) * itemsize)

    h_seq, c_last = pl.pallas_call(
        functools.partial(lnlstm_seq_kernel, hidden=H, mxu_dtype=mxu_dtype),
        out_shape=(jax.ShapeDtypeStruct((T, B, H), xs.dtype),
                   jax.ShapeDtypeStruct((B, H), xs.dtype)),
        grid=(nb, nt),
        in_specs=[pl.BlockSpec((Tb, batch_block, I), lambda b, t: (t, b, 0)),
                  pl.BlockSpec((batch_block, H), lambda b, t: (b, 0)),
                  pl.BlockSpec((batch_block, H), lambda b, t: (b, 0)),
                  const((I, G)), const((H, G)),
                  const((1, G)), const((1, G)),
                  const((1, G)), const((1, G)),
                  const((1, H)), const((1, H))],
        out_specs=(pl.BlockSpec((Tb, batch_block, H), lambda b, t: (t, b, 0)),
                   pl.BlockSpec((batch_block, H), lambda b, t: (b, 0))),
        scratch_shapes=[pltpu.VMEM((batch_block, H), jnp.float32),   # carried h
                        pltpu.VMEM((batch_block, H), jnp.float32)],  # carried c
        compiler_params=pltpu.CompilerParams(
            dimension_semantics=("parallel", "arbitrary"),  # batch || , time seq
            vmem_limit_bytes=vmem_limit),
        cost_estimate=cost,
    )(xs, h0, c0, wih_t, whh_t, gi, bi, gh, bh, gc, bc)
    return h_seq, (h_seq[-1], c_last)


# ---------------------------------------------------------------------------
# Pure-JAX reference (two-pass LN, PyTorch semantics) for validation.
# ---------------------------------------------------------------------------
def _ln_ref(v, g, b):
    mean = jnp.mean(v, axis=-1, keepdims=True)
    var = jnp.mean((v - mean) ** 2, axis=-1, keepdims=True)
    return (v - mean) * jax.lax.rsqrt(var + EPS) * g + b


def _cell_ref(x, h0, c0, w_ih, w_hh, gi, bi, gh, bh, gc, bc,
              mxu_dtype=jnp.float32):
    dn = (((1,), (1,)), ((), ()))
    ig = jax.lax.dot_general(x.astype(mxu_dtype), w_ih.astype(mxu_dtype), dn,
                             preferred_element_type=jnp.float32,
                             precision=jax.lax.Precision.HIGHEST)
    hg = jax.lax.dot_general(h0.astype(mxu_dtype), w_hh.astype(mxu_dtype), dn,
                             preferred_element_type=jnp.float32,
                             precision=jax.lax.Precision.HIGHEST)
    gates = _ln_ref(ig, gi, bi) + _ln_ref(hg, gh, bh)
    H = h0.shape[1]
    i = jax.nn.sigmoid(gates[:, :H])
    f = jax.nn.sigmoid(gates[:, H:2 * H])
    g = jnp.tanh(gates[:, 2 * H:3 * H])
    o = jax.nn.sigmoid(gates[:, 3 * H:])
    c1 = _ln_ref(f * c0 + i * g, gc, bc)
    h1 = o * jnp.tanh(c1)
    return h1, c1


if __name__ == "__main__":
    key = jax.random.PRNGKey(0)
    B, I, H, T = 8, 32, 32, 8           # batch, input, hidden (4H = 128), seq len
    k0, k1, k2, k3, k4, k5 = jax.random.split(key, 6)

    x = jax.random.normal(k0, (B, I), jnp.float32)
    h0 = jax.random.normal(k1, (B, H), jnp.float32)
    c0 = jax.random.normal(k2, (B, H), jnp.float32)
    xs = jax.random.normal(k5, (T, B, I), jnp.float32)

    # Parameters: torch.randn weights; nn.LayerNorm default init gamma=1, beta=0.
    w_ih = jax.random.normal(k3, (4 * H, I), jnp.float32)
    w_hh = jax.random.normal(k4, (4 * H, H), jnp.float32)
    gamma_i = jnp.ones((4 * H,), jnp.float32); beta_i = jnp.zeros((4 * H,), jnp.float32)
    gamma_h = jnp.ones((4 * H,), jnp.float32); beta_h = jnp.zeros((4 * H,), jnp.float32)
    gamma_c = jnp.ones((H,), jnp.float32);     beta_c = jnp.zeros((H,), jnp.float32)

    params = (w_ih, w_hh, gamma_i, beta_i, gamma_h, beta_h, gamma_c, beta_c)
    ref_norms = (gamma_i.reshape(1, -1), beta_i.reshape(1, -1),
                 gamma_h.reshape(1, -1), beta_h.reshape(1, -1),
                 gamma_c.reshape(1, -1), beta_c.reshape(1, -1))

    # 1) f32-MXU path: faithful check against the PyTorch-style reference.
    h1, (h1_s, c1) = layernorm_lstm_cell(x, (h0, c0), *params,
                                         mxu_dtype=jnp.float32)
    jax.block_until_ready((h1, c1))
    h_ref, c_ref = _cell_ref(x, h0, c0, w_ih, w_hh, *ref_norms,
                             mxu_dtype=jnp.float32)
    assert jnp.allclose(h1, h_ref, atol=1e-4, rtol=1e-4)
    assert jnp.allclose(c1, c_ref, atol=1e-4, rtol=1e-4)

    # 2) bf16-MXU perf path (default) vs. a reference using the same bf16
    #    operands with f32 accumulation.
    h1b, (_, c1b) = layernorm_lstm_cell(x, (h0, c0), *params)
    jax.block_until_ready((h1b, c1b))
    h_refb, c_refb = _cell_ref(x, h0, c0, w_ih, w_hh, *ref_norms,
                               mxu_dtype=jnp.bfloat16)
    assert jnp.allclose(h1b, h_refb, atol=5e-3, rtol=5e-3)
    assert jnp.allclose(c1b, c_refb, atol=5e-3, rtol=5e-3)

    # 3) Time-blocked, weight-stationary sequence kernel vs. scanning the
    #    reference cell (f32 MXU path for a tight check).
    hs, (h_last, c_last) = layernorm_lstm_sequence(xs, (h0, c0), *params,
                                                   mxu_dtype=jnp.float32)
    jax.block_until_ready((hs, h_last, c_last))

    def scan_step(carry, xt):
        h, c = carry
        h1r, c1r = _cell_ref(xt, h, c, w_ih, w_hh, *ref_norms,
                             mxu_dtype=jnp.float32)
        return (h1r, c1r), h1r

    (h_ref_last, c_ref_last), hs_ref = jax.lax.scan(scan_step, (h0, c0), xs)
    assert jnp.allclose(hs, hs_ref, atol=5e-4, rtol=5e-4)
    assert jnp.allclose(h_last, h_ref_last, atol=5e-4, rtol=5e-4)
    assert jnp.allclose(c_last, c_ref_last, atol=5e-4, rtol=5e-4)

    # 4) bf16 default sequence path smoke-run (bf16 matmul drift compounds over
    #    T, so no tight assert here; validated separately at realistic T).
    hs_b, (hl_b, cl_b) = layernorm_lstm_sequence(xs, (h0, c0), *params,
                                                 time_block=4)
    jax.block_until_ready((hs_b, hl_b, cl_b))

    print("KERNEL_OK")
</pallas_src>

<mosaic_0001>
module attributes {stable_mosaic.version = 11 : i64} {
  func.func @lnlstm_cell_kernel(%arg0: i32, %arg1: memref<8x32xf32, #tpu.memory_space<vmem>>, %arg2: memref<8x32xf32, #tpu.memory_space<vmem>>, %arg3: memref<8x32xf32, #tpu.memory_space<vmem>>, %arg4: memref<32x128xf32, #tpu.memory_space<vmem>>, %arg5: memref<32x128xf32, #tpu.memory_space<vmem>>, %arg6: memref<1x128xf32, #tpu.memory_space<vmem>>, %arg7: memref<1x128xf32, #tpu.memory_space<vmem>>, %arg8: memref<1x128xf32, #tpu.memory_space<vmem>>, %arg9: memref<1x128xf32, #tpu.memory_space<vmem>>, %arg10: memref<1x32xf32, #tpu.memory_space<vmem>>, %arg11: memref<1x32xf32, #tpu.memory_space<vmem>>, %arg12: memref<8x64xf32, #tpu.memory_space<vmem>>) attributes {dimension_semantics = [#tpu.dimension_semantics<parallel>], iteration_bounds = array<i64: 1>, scalar_prefetch = 0 : i64, scratch_operands = 0 : i64, tpu.core_type = #tpu.core_type<tc>, window_params = [{transform_indices = @transform_0, window_bounds = array<i64: 8, 32>}, {transform_indices = @transform_1, window_bounds = array<i64: 8, 32>}, {transform_indices = @transform_2, window_bounds = array<i64: 8, 32>}, {pipeline_mode = #tpu.pipeline_mode<synchronous>, transform_indices = @transform_3, window_bounds = array<i64: 32, 128>}, {pipeline_mode = #tpu.pipeline_mode<synchronous>, transform_indices = @transform_4, window_bounds = array<i64: 32, 128>}, {pipeline_mode = #tpu.pipeline_mode<synchronous>, transform_indices = @transform_5, window_bounds = array<i64: 1, 128>}, {pipeline_mode = #tpu.pipeline_mode<synchronous>, transform_indices = @transform_6, window_bounds = array<i64: 1, 128>}, {pipeline_mode = #tpu.pipeline_mode<synchronous>, transform_indices = @transform_7, window_bounds = array<i64: 1, 128>}, {pipeline_mode = #tpu.pipeline_mode<synchronous>, transform_indices = @transform_8, window_bounds = array<i64: 1, 128>}, {pipeline_mode = #tpu.pipeline_mode<synchronous>, transform_indices = @transform_9, window_bounds = array<i64: 1, 32>}, {pipeline_mode = #tpu.pipeline_mode<synchronous>, transform_indices = @transform_10, window_bounds = array<i64: 1, 32>}, {transform_indices = @transform_11, window_bounds = array<i64: 8, 64>}]} {
    %c0 = arith.constant 0 : index
    %c0_0 = arith.constant 0 : index
    %0 = vector.load %arg1[%c0, %c0_0] : memref<8x32xf32, #tpu.memory_space<vmem>>, vector<8x32xf32>
    %c0_1 = arith.constant 0 : index
    %c0_2 = arith.constant 0 : index
    %1 = vector.load %arg4[%c0_1, %c0_2] : memref<32x128xf32, #tpu.memory_space<vmem>>, vector<32x128xf32>
    %cst = arith.constant dense<0.000000e+00> : vector<8x128xf32>
    %2 = tpu.matmul %0, %1, %cst {dimension_numbers = #tpu.dot_dimension_numbers<[1], [0], [0], [1], [0, 0, 1, 1], [], []>} : vector<8x32xf32>, vector<32x128xf32>, vector<8x128xf32> -> vector<8x128xf32>
    %c0_3 = arith.constant 0 : index
    %c0_4 = arith.constant 0 : index
    %3 = vector.load %arg6[%c0_3, %c0_4] : memref<1x128xf32, #tpu.memory_space<vmem>>, vector<1x128xf32>
    %c0_5 = arith.constant 0 : index
    %c0_6 = arith.constant 0 : index
    %4 = vector.load %arg7[%c0_5, %c0_6] : memref<1x128xf32, #tpu.memory_space<vmem>>, vector<1x128xf32>
    %cst_7 = arith.constant dense<0.000000e+00> : vector<8xf32>
    %5 = vector.multi_reduction <add>, %2, %cst_7 [1] : vector<8x128xf32> to vector<8xf32>
    %6 = vector.shape_cast %5 : vector<8xf32> to vector<8x1xf32>
    %cst_8 = arith.constant 1.280000e+02 : f32
    %7 = vector.broadcast %cst_8 : f32 to vector<8x1xf32>
    %8 = arith.divf %6, %7 : vector<8x1xf32>
    %9 = arith.mulf %2, %2 : vector<8x128xf32>
    %cst_9 = arith.constant dense<0.000000e+00> : vector<8xf32>
    %10 = vector.multi_reduction <add>, %9, %cst_9 [1] : vector<8x128xf32> to vector<8xf32>
    %11 = vector.shape_cast %10 : vector<8xf32> to vector<8x1xf32>
    %cst_10 = arith.constant 1.280000e+02 : f32
    %12 = vector.broadcast %cst_10 : f32 to vector<8x1xf32>
    %13 = arith.divf %11, %12 : vector<8x1xf32>
    %14 = arith.mulf %8, %8 : vector<8x1xf32>
    %15 = arith.subf %13, %14 : vector<8x1xf32>
    %cst_11 = arith.constant 0.000000e+00 : f32
    %16 = vector.broadcast %cst_11 : f32 to vector<8x1xf32>
    %17 = arith.maximumf %15, %16 : vector<8x1xf32>
    %18 = vector.broadcast %8 : vector<8x1xf32> to vector<8x128xf32>
    %19 = arith.subf %2, %18 : vector<8x128xf32>
    %cst_12 = arith.constant 9.99999974E-6 : f32
    %20 = vector.broadcast %cst_12 : f32 to vector<8x1xf32>
    %21 = arith.addf %17, %20 : vector<8x1xf32>
    %22 = math.rsqrt %21 : vector<8x1xf32>
    %23 = vector.broadcast %22 : vector<8x1xf32> to vector<8x128xf32>
    %24 = arith.mulf %19, %23 : vector<8x128xf32>
    %25 = vector.broadcast %3 : vector<1x128xf32> to vector<8x128xf32>
    %26 = arith.mulf %24, %25 : vector<8x128xf32>
    %27 = vector.broadcast %4 : vector<1x128xf32> to vector<8x128xf32>
    %28 = arith.addf %26, %27 : vector<8x128xf32>
    %c0_13 = arith.constant 0 : index
    %c0_14 = arith.constant 0 : index
    %29 = vector.load %arg2[%c0_13, %c0_14] : memref<8x32xf32, #tpu.memory_space<vmem>>, vector<8x32xf32>
    %c0_15 = arith.constant 0 : index
    %c0_16 = arith.constant 0 : index
    %30 = vector.load %arg3[%c0_15, %c0_16] : memref<8x32xf32, #tpu.memory_space<vmem>>, vector<8x32xf32>
    %c0_17 = arith.constant 0 : index
    %c0_18 = arith.constant 0 : index
    %31 = vector.load %arg5[%c0_17, %c0_18] : memref<32x128xf32, #tpu.memory_space<vmem>>, vector<32x128xf32>
    %c0_19 = arith.constant 0 : index
    %c0_20 = arith.constant 0 : index
    %32 = vector.load %arg8[%c0_19, %c0_20] : memref<1x128xf32, #tpu.memory_space<vmem>>, vector<1x128xf32>
    %c0_21 = arith.constant 0 : index
    %c0_22 = arith.constant 0 : index
    %33 = vector.load %arg9[%c0_21, %c0_22] : memref<1x128xf32, #tpu.memory_space<vmem>>, vector<1x128xf32>
    %c0_23 = arith.constant 0 : index
    %c0_24 = arith.constant 0 : index
    %34 = vector.load %arg10[%c0_23, %c0_24] : memref<1x32xf32, #tpu.memory_space<vmem>>, vector<1x32xf32>
    %c0_25 = arith.constant 0 : index
    %c0_26 = arith.constant 0 : index
    %35 = vector.load %arg11[%c0_25, %c0_26] : memref<1x32xf32, #tpu.memory_space<vmem>>, vector<1x32xf32>
    %cst_27 = arith.constant dense<0.000000e+00> : vector<8x128xf32>
    %36 = tpu.matmul %29, %31, %cst_27 {dimension_numbers = #tpu.dot_dimension_numbers<[1], [0], [0], [1], [0, 0, 1, 1], [], []>} : vector<8x32xf32>, vector<32x128xf32>, vector<8x128xf32> -> vector<8x128xf32>
    %cst_28 = arith.constant dense<0.000000e+00> : vector<8xf32>
    %37 = vector.multi_reduction <add>, %36, %cst_28 [1] : vector<8x128xf32> to vector<8xf32>
    %38 = vector.shape_cast %37 : vector<8xf32> to vector<8x1xf32>
    %cst_29 = arith.constant 1.280000e+02 : f32
    %39 = vector.broadcast %cst_29 : f32 to vector<8x1xf32>
    %40 = arith.divf %38, %39 : vector<8x1xf32>
    %41 = arith.mulf %36, %36 : vector<8x128xf32>
    %cst_30 = arith.constant dense<0.000000e+00> : vector<8xf32>
    %42 = vector.multi_reduction <add>, %41, %cst_30 [1] : vector<8x128xf32> to vector<8xf32>
    %43 = vector.shape_cast %42 : vector<8xf32> to vector<8x1xf32>
    %cst_31 = arith.constant 1.280000e+02 : f32
    %44 = vector.broadcast %cst_31 : f32 to vector<8x1xf32>
    %45 = arith.divf %43, %44 : vector<8x1xf32>
    %46 = arith.mulf %40, %40 : vector<8x1xf32>
    %47 = arith.subf %45, %46 : vector<8x1xf32>
    %cst_32 = arith.constant 0.000000e+00 : f32
    %48 = vector.broadcast %cst_32 : f32 to vector<8x1xf32>
    %49 = arith.maximumf %47, %48 : vector<8x1xf32>
    %50 = vector.broadcast %40 : vector<8x1xf32> to vector<8x128xf32>
    %51 = arith.subf %36, %50 : vector<8x128xf32>
    %cst_33 = arith.constant 9.99999974E-6 : f32
    %52 = vector.broadcast %cst_33 : f32 to vector<8x1xf32>
    %53 = arith.addf %49, %52 : vector<8x1xf32>
    %54 = math.rsqrt %53 : vector<8x1xf32>
    %55 = vector.broadcast %54 : vector<8x1xf32> to vector<8x128xf32>
    %56 = arith.mulf %51, %55 : vector<8x128xf32>
    %57 = vector.broadcast %32 : vector<1x128xf32> to vector<8x128xf32>
    %58 = arith.mulf %56, %57 : vector<8x128xf32>
    %59 = vector.broadcast %33 : vector<1x128xf32> to vector<8x128xf32>
    %60 = arith.addf %58, %59 : vector<8x128xf32>
    %61 = arith.addf %28, %60 : vector<8x128xf32>
    %62 = tpu.iota {dimensions = array<i32: 1>} : vector<8x128xi32>
    %c64_i32 = arith.constant 64 : i32
    %63 = vector.broadcast %c64_i32 : i32 to vector<8x128xi32>
    %64 = arith.cmpi sge, %62, %63 : vector<8x128xi32>
    %c96_i32 = arith.constant 96 : i32
    %65 = vector.broadcast %c96_i32 : i32 to vector<8x128xi32>
    %66 = arith.cmpi slt, %62, %65 : vector<8x128xi32>
    %67 = arith.andi %64, %66 : vector<8x128xi1>
    %68 = math.tanh %61 : vector<8x128xf32>
    %69 = arith.negf %61 : vector<8x128xf32>
    %70 = math.exp %69 : vector<8x128xf32>
    %cst_34 = arith.constant 1.000000e+00 : f32
    %71 = vector.broadcast %cst_34 : f32 to vector<8x128xf32>
    %72 = arith.addf %71, %70 : vector<8x128xf32>
    %73 = arith.divf %71, %72 : vector<8x128xf32>
    %74 = arith.select %67, %68, %73 : vector<8x128xi1>, vector<8x128xf32>
    %75 = vector.extract_strided_slice %74 {offsets = [0, 0], sizes = [8, 32], strides = [1, 1]} : vector<8x128xf32> to vector<8x32xf32>
    %76 = vector.extract_strided_slice %74 {offsets = [0, 32], sizes = [8, 32], strides = [1, 1]} : vector<8x128xf32> to vector<8x32xf32>
    %77 = vector.extract_strided_slice %74 {offsets = [0, 64], sizes = [8, 32], strides = [1, 1]} : vector<8x128xf32> to vector<8x32xf32>
    %78 = vector.extract_strided_slice %74 {offsets = [0, 96], sizes = [8, 32], strides = [1, 1]} : vector<8x128xf32> to vector<8x32xf32>
    %79 = arith.mulf %76, %30 : vector<8x32xf32>
    %80 = arith.mulf %75, %77 : vector<8x32xf32>
    %81 = arith.addf %79, %80 : vector<8x32xf32>
    %cst_35 = arith.constant dense<0.000000e+00> : vector<8xf32>
    %82 = vector.multi_reduction <add>, %81, %cst_35 [1] : vector<8x32xf32> to vector<8xf32>
    %83 = vector.shape_cast %82 : vector<8xf32> to vector<8x1xf32>
    %cst_36 = arith.constant 3.200000e+01 : f32
    %84 = vector.broadcast %cst_36 : f32 to vector<8x1xf32>
    %85 = arith.divf %83, %84 : vector<8x1xf32>
    %86 = arith.mulf %81, %81 : vector<8x32xf32>
    %cst_37 = arith.constant dense<0.000000e+00> : vector<8xf32>
    %87 = vector.multi_reduction <add>, %86, %cst_37 [1] : vector<8x32xf32> to vector<8xf32>
    %88 = vector.shape_cast %87 : vector<8xf32> to vector<8x1xf32>
    %cst_38 = arith.constant 3.200000e+01 : f32
    %89 = vector.broadcast %cst_38 : f32 to vector<8x1xf32>
    %90 = arith.divf %88, %89 : vector<8x1xf32>
    %91 = arith.mulf %85, %85 : vector<8x1xf32>
    %92 = arith.subf %90, %91 : vector<8x1xf32>
    %cst_39 = arith.constant 0.000000e+00 : f32
    %93 = vector.broadcast %cst_39 : f32 to vector<8x1xf32>
    %94 = arith.maximumf %92, %93 : vector<8x1xf32>
    %95 = vector.broadcast %85 : vector<8x1xf32> to vector<8x32xf32>
    %96 = arith.subf %81, %95 : vector<8x32xf32>
    %cst_40 = arith.constant 9.99999974E-6 : f32
    %97 = vector.broadcast %cst_40 : f32 to vector<8x1xf32>
    %98 = arith.addf %94, %97 : vector<8x1xf32>
    %99 = math.rsqrt %98 : vector<8x1xf32>
    %100 = vector.broadcast %99 : vector<8x1xf32> to vector<8x32xf32>
    %101 = arith.mulf %96, %100 : vector<8x32xf32>
    %102 = vector.broadcast %34 : vector<1x32xf32> to vector<8x32xf32>
    %103 = arith.mulf %101, %102 : vector<8x32xf32>
    %104 = vector.broadcast %35 : vector<1x32xf32> to vector<8x32xf32>
    %105 = arith.addf %103, %104 : vector<8x32xf32>
    %106 = math.tanh %105 : vector<8x32xf32>
    %107 = arith.mulf %78, %106 : vector<8x32xf32>
    %c0_41 = arith.constant 0 : index
    %c0_42 = arith.constant 0 : index
    %108 = vector.load %arg12[%c0_41, %c0_42] : memref<8x64xf32, #tpu.memory_space<vmem>>, vector<8x32xf32>
    tpu.vector_store %arg12[%c0_41, %c0_42], %107 {strides = array<i32>} : memref<8x64xf32, #tpu.memory_space<vmem>>, vector<8x32xf32>,
    %c0_43 = arith.constant 0 : index
    %c32 = arith.constant 32 : index
    %109 = vector.load %arg12[%c0_43, %c32] : memref<8x64xf32, #tpu.memory_space<vmem>>, vector<8x32xf32>
    tpu.vector_store %arg12[%c0_43, %c32], %105 {strides = array<i32>} : memref<8x64xf32, #tpu.memory_space<vmem>>, vector<8x32xf32>,
    return
  }
  func.func @transform_0(%arg0: i32) -> (i32, i32) {
    %c0_i32 = arith.constant 0 : i32
    %c0_i32_0 = arith.constant 0 : i32
    return %arg0, %c0_i32 : i32, i32
  }
  func.func @transform_1(%arg0: i32) -> (i32, i32) {
    %c0_i32 = arith.constant 0 : i32
    %c0_i32_0 = arith.constant 0 : i32
    return %arg0, %c0_i32 : i32, i32
  }
  func.func @transform_2(%arg0: i32) -> (i32, i32) {
    %c0_i32 = arith.constant 0 : i32
    %c0_i32_0 = arith.constant 0 : i32
    return %arg0, %c0_i32 : i32, i32
  }
  func.func @transform_3(%arg0: i32) -> (i32, i32) {
    %c0_i32 = arith.constant 0 : i32
    %c0_i32_0 = arith.constant 0 : i32
    %c0_i32_1 = arith.constant 0 : i32
    return %c0_i32, %c0_i32_0 : i32, i32
  }
  func.func @transform_4(%arg0: i32) -> (i32, i32) {
    %c0_i32 = arith.constant 0 : i32
    %c0_i32_0 = arith.constant 0 : i32
    %c0_i32_1 = arith.constant 0 : i32
    return %c0_i32, %c0_i32_0 : i32, i32
  }
  func.func @transform_5(%arg0: i32) -> (i32, i32) {
    %c0_i32 = arith.constant 0 : i32
    %c0_i32_0 = arith.constant 0 : i32
    %c0_i32_1 = arith.constant 0 : i32
    return %c0_i32, %c0_i32_0 : i32, i32
  }
  func.func @transform_6(%arg0: i32) -> (i32, i32) {
    %c0_i32 = arith.constant 0 : i32
    %c0_i32_0 = arith.constant 0 : i32
    %c0_i32_1 = arith.constant 0 : i32
    return %c0_i32, %c0_i32_0 : i32, i32
  }
  func.func @transform_7(%arg0: i32) -> (i32, i32) {
    %c0_i32 = arith.constant 0 : i32
    %c0_i32_0 = arith.constant 0 : i32
    %c0_i32_1 = arith.constant 0 : i32
    return %c0_i32, %c0_i32_0 : i32, i32
  }
  func.func @transform_8(%arg0: i32) -> (i32, i32) {
    %c0_i32 = arith.constant 0 : i32
    %c0_i32_0 = arith.constant 0 : i32
    %c0_i32_1 = arith.constant 0 : i32
    return %c0_i32, %c0_i32_0 : i32, i32
  }
  func.func @transform_9(%arg0: i32) -> (i32, i32) {
    %c0_i32 = arith.constant 0 : i32
    %c0_i32_0 = arith.constant 0 : i32
    %c0_i32_1 = arith.constant 0 : i32
    return %c0_i32, %c0_i32_0 : i32, i32
  }
  func.func @transform_10(%arg0: i32) -> (i32, i32) {
    %c0_i32 = arith.constant 0 : i32
    %c0_i32_0 = arith.constant 0 : i32
    %c0_i32_1 = arith.constant 0 : i32
    return %c0_i32, %c0_i32_0 : i32, i32
  }
  func.func @transform_11(%arg0: i32) -> (i32, i32) {
    %c0_i32 = arith.constant 0 : i32
    %c0_i32_0 = arith.constant 0 : i32
    return %arg0, %c0_i32 : i32, i32
  }
}

</mosaic_0001>

<llo_original>
// kernel: tpu_custom_call.1
$region0: #{tpu_custom_call.1}
  #allocation0 [shape = 'u32[]', space=smem, size = 0x4, offset = 0x4, fixed_abs, tag = 'smem constant byte address 0x4 - core index']
  #allocation1 [shape = 'u32[72,128]{1,0:T(1,128)}', space=vmem, size = 0x9000, scoped, tag = 'internal scratch']
  %s0 = inlined_call_operand.hbm [shape: f32[8,32], index: 0, kind: input, shape index: {}]
  %s1 = inlined_call_operand.hbm [shape: f32[8,32], index: 1, kind: input, shape index: {}]
  %s2 = inlined_call_operand.hbm [shape: f32[8,32], index: 2, kind: input, shape index: {}]
  %s3 = inlined_call_operand.hbm [shape: f32[32,128], index: 3, kind: input, shape index: {}]
  %s4 = inlined_call_operand.hbm [shape: f32[32,128], index: 4, kind: input, shape index: {}]
  %s5 = inlined_call_operand.vmem [shape: f32[1,128], index: 5, kind: input, shape index: {}]
  %s6 = inlined_call_operand.vmem [shape: f32[1,128], index: 6, kind: input, shape index: {}]
  %s7 = inlined_call_operand.vmem [shape: f32[1,128], index: 7, kind: input, shape index: {}]
  %s8 = inlined_call_operand.vmem [shape: f32[1,128], index: 8, kind: input, shape index: {}]
  %s9 = inlined_call_operand.vmem [shape: f32[1,32], index: 9, kind: input, shape index: {}]
  %s10 = inlined_call_operand.vmem [shape: f32[1,32], index: 10, kind: input, shape index: {}]
  %s11 = inlined_call_operand.hbm [shape: f32[8,64], index: 11, kind: output, shape index: {}]
  %s12 = sld [smem:[#allocation0]]
  $region74: #{tpu_custom_call.1} parent=0
    _
  %s14 = ssub.s32 1, %s12
  %s15 = scalar_select 0, %s14, %s12
  $region1: #{tpu_custom_call.1} parent=0
    #allocation2 [shape = 'u8[4096]{0}', space=vmem, size = 0x1000, scoped, tag = 'input window, operand 0, single buffered']
    #allocation3 [shape = 's32[1]{0}', space=sflag, size = 0x4, scoped, tag = 'scoped memory for tpu_custom_call.1']
    #allocation4 [shape = 's32[1]{0}', space=sflag, size = 0x4, scoped, tag = 'scoped memory for tpu_custom_call.1']
    #allocation5 [shape = 'u8[4096]{0}', space=vmem, size = 0x1000, scoped, tag = 'input window, operand 1, single buffered']
    #allocation6 [shape = 's32[1]{0}', space=sflag, size = 0x4, scoped, tag = 'scoped memory for tpu_custom_call.1']
    #allocation7 [shape = 'u8[4096]{0}', space=vmem, size = 0x1000, scoped, tag = 'input window, operand 2, single buffered']
    #allocation8 [shape = 'u8[16384]{0}', space=vmem, size = 0x4000, scoped, tag = 'input window, operand 3, single buffered']
    #allocation9 [shape = 's32[1]{0}', space=sflag, size = 0x4, scoped, tag = 'scoped memory for tpu_custom_call.1']
    #allocation10 [shape = 'u8[16384]{0}', space=vmem, size = 0x4000, scoped, tag = 'input window, operand 4, single buffered']
    #allocation11 [shape = 'u8[4096]{0}', space=vmem, size = 0x1000, scoped, tag = 'output window, operand 0, single buffered']
    %16 = vsyncpa [#allocation3], 0
    %17 = vsyncpa [#allocation6], 0
    %18 = vsyncpa [#allocation9], 0
    %19 = vsyncpa [#allocation4], 0
    // Predicated region
    $region2: #{tpu_custom_call.1} parent=1 // pred_check
      _
    $region3: #{tpu_custom_call.1} parent=1 // pred_check_branch
      %21 = sbr.rel (0) target = $region5
    $region4: #{tpu_custom_call.1} parent=1 // pred_region
      %23 = vsyncadd [#allocation3], 0
      %s25 = sshll.u32 %s0, 4
      %s26 = int_to_ptr.hbm [resolvable:$true] %s25
      %s27 = sshll.u32 [#allocation2], 4
      %s28 = int_to_ptr.vmem [resolvable:$true] %s27
      %30 = dma.hbm_to_vmem [thread:$0]  %s26, 128, %s28, [#allocation3]
    $region5: #{tpu_custom_call.1} parent=1 // pred_fallthru
      _
    // Predicated region
    $region6: #{tpu_custom_call.1} parent=1 // pred_check
      _
    $region7: #{tpu_custom_call.1} parent=1 // pred_check_branch
      %32 = sbr.rel (0) target = $region9
    $region8: #{tpu_custom_call.1} parent=1 // pred_region
      %34 = vsyncadd [#allocation6], 0
      %s36 = sshll.u32 %s1, 4
      %s37 = int_to_ptr.hbm [resolvable:$true] %s36
      %s38 = sshll.u32 [#allocation5], 4
      %s39 = int_to_ptr.vmem [resolvable:$true] %s38
      %41 = dma.hbm_to_vmem [thread:$0]  %s37, 128, %s39, [#allocation6]
    $region9: #{tpu_custom_call.1} parent=1 // pred_fallthru
      _
    // Predicated region
    $region10: #{tpu_custom_call.1} parent=1 // pred_check
      _
    $region11: #{tpu_custom_call.1} parent=1 // pred_check_branch
      %43 = sbr.rel (0) target = $region13
    $region12: #{tpu_custom_call.1} parent=1 // pred_region
      %45 = vsyncadd [#allocation6], 0
      %s47 = sshll.u32 %s2, 4
      %s48 = int_to_ptr.hbm [resolvable:$true] %s47
      %s49 = sshll.u32 [#allocation7], 4
      %s50 = int_to_ptr.vmem [resolvable:$true] %s49
      %52 = dma.hbm_to_vmem [thread:$0]  %s48, 128, %s50, [#allocation6]
    $region13: #{tpu_custom_call.1} parent=1 // pred_fallthru
      _
    // Predicated region
    $region14: #{tpu_custom_call.1} parent=1 // pred_check
      _
    $region15: #{tpu_custom_call.1} parent=1 // pred_check_branch
      %54 = sbr.rel (0) target = $region17
    $region16: #{tpu_custom_call.1} parent=1 // pred_region
      %56 = vsyncadd [#allocation9], 0
      %s57 = sshll.u32 %s3, 4
      %s58 = int_to_ptr.hbm [resolvable:$true] %s57
      %s59 = sshll.u32 [#allocation8], 4
      %s60 = int_to_ptr.vmem [resolvable:$true] %s59
      %65 = dma.hbm_to_vmem [thread:$0]  %s58, 512, %s60, [#allocation9], 128, 128, 8
    $region17: #{tpu_custom_call.1} parent=1 // pred_fallthru
      _
    // Predicated region
    $region18: #{tpu_custom_call.1} parent=1 // pred_check
      _
    $region19: #{tpu_custom_call.1} parent=1 // pred_check_branch
      %67 = sbr.rel (0) target = $region21
    $region20: #{tpu_custom_call.1} parent=1 // pred_region
      %69 = vsyncadd [#allocation9], 0
      %s70 = sshll.u32 %s4, 4
      %s71 = int_to_ptr.hbm [resolvable:$true] %s70
      %s72 = sshll.u32 [#allocation10], 4
      %s73 = int_to_ptr.vmem [resolvable:$true] %s72
      %78 = dma.hbm_to_vmem [thread:$0]  %s71, 512, %s73, [#allocation9], 128, 128, 8
    $region21: #{tpu_custom_call.1} parent=1 // pred_fallthru
      _
    // Predicated region
    $region22: #{tpu_custom_call.1} parent=1 // pred_check
      _
    $region23: #{tpu_custom_call.1} parent=1 // pred_check_branch
      %80 = sbr.rel (0) target = $region25
    $region24: #{tpu_custom_call.1} parent=1 // pred_region
      _
    $region25: #{tpu_custom_call.1} parent=1 // pred_fallthru
      _
    // Predicated region
    $region26: #{tpu_custom_call.1} parent=1 // pred_check
      _
    $region27: #{tpu_custom_call.1} parent=1 // pred_check_branch
      %82 = sbr.rel (0) target = $region29
    $region28: #{tpu_custom_call.1} parent=1 // pred_region
      _
    $region29: #{tpu_custom_call.1} parent=1 // pred_fallthru
      _
    // Predicated region
    $region30: #{tpu_custom_call.1} parent=1 // pred_check
      _
    $region31: #{tpu_custom_call.1} parent=1 // pred_check_branch
      %84 = sbr.rel (0) target = $region33
    $region32: #{tpu_custom_call.1} parent=1 // pred_region
      _
    $region33: #{tpu_custom_call.1} parent=1 // pred_fallthru
      _
    // Predicated region
    $region34: #{tpu_custom_call.1} parent=1 // pred_check
      _
    $region35: #{tpu_custom_call.1} parent=1 // pred_check_branch
      %86 = sbr.rel (0) target = $region37
    $region36: #{tpu_custom_call.1} parent=1 // pred_region
      _
    $region37: #{tpu_custom_call.1} parent=1 // pred_fallthru
      _
    // Predicated region
    $region38: #{tpu_custom_call.1} parent=1 // pred_check
      _
    $region39: #{tpu_custom_call.1} parent=1 // pred_check_branch
      %88 = sbr.rel (0) target = $region41
    $region40: #{tpu_custom_call.1} parent=1 // pred_region
      _
    $region41: #{tpu_custom_call.1} parent=1 // pred_fallthru
      _
    // Predicated region
    $region42: #{tpu_custom_call.1} parent=1 // pred_check
      _
    $region43: #{tpu_custom_call.1} parent=1 // pred_check_branch
      %90 = sbr.rel (0) target = $region45
    $region44: #{tpu_custom_call.1} parent=1 // pred_region
      _
    $region45: #{tpu_custom_call.1} parent=1 // pred_fallthru
      _
    // Predicated region
    $region46: #{tpu_custom_call.1} parent=1 // pred_check
      _
    $region47: #{tpu_custom_call.1} parent=1 // pred_check_branch
      %92 = sbr.rel (0) target = $region49
    $region48: #{tpu_custom_call.1} parent=1 // pred_region
      %94 = dma.done [#allocation3], 128
    $region49: #{tpu_custom_call.1} parent=1 // pred_fallthru
      _
    // Predicated region
    $region50: #{tpu_custom_call.1} parent=1 // pred_check
      _
    $region51: #{tpu_custom_call.1} parent=1 // pred_check_branch
      %96 = sbr.rel (0) target = $region53
    $region52: #{tpu_custom_call.1} parent=1 // pred_region
      %98 = dma.done [#allocation6], 128
    $region53: #{tpu_custom_call.1} parent=1 // pred_fallthru
      _
    // Predicated region
    $region54: #{tpu_custom_call.1} parent=1 // pred_check
      _
    $region55: #{tpu_custom_call.1} parent=1 // pred_check_branch
      %100 = sbr.rel (0) target = $region57
    $region56: #{tpu_custom_call.1} parent=1 // pred_region
      %102 = dma.done [#allocation6], 128
    $region57: #{tpu_custom_call.1} parent=1 // pred_fallthru
      _
    // Predicated region
    $region58: #{tpu_custom_call.1} parent=1 // pred_check
      _
    $region59: #{tpu_custom_call.1} parent=1 // pred_check_branch
      %104 = sbr.rel (0) target = $region61
    $region60: #{tpu_custom_call.1} parent=1 // pred_region
      %106 = dma.done [#allocation9], 512
    $region61: #{tpu_custom_call.1} parent=1 // pred_fallthru
      _
    // Predicated region
    $region62: #{tpu_custom_call.1} parent=1 // pred_check
      _
    $region63: #{tpu_custom_call.1} parent=1 // pred_check_branch
      %108 = sbr.rel (0) target = $region65
    $region64: #{tpu_custom_call.1} parent=1 // pred_region
      %110 = dma.done [#allocation9], 512
    $region65: #{tpu_custom_call.1} parent=1 // pred_fallthru
      _
    %v111 = vld [vmem:[#allocation2] sm:$0xff]
    %v112 = vld [vmem:[#allocation8] sm:$0xff]
    %v113 = vld [vmem:[#allocation8 + $0x8] sm:$0xff]
    %v114 = vld [vmem:[#allocation8 + $0x10] sm:$0xff]
    %v115 = vld [vmem:[#allocation8 + $0x18] sm:$0xff]
    %vm116 = vcmask 261120
    %v118 = vsel %vm116, %v111, 0
    %120 = vmatpush.msra.mxu0 0.0
    %121 = vmatpush.msra.mxu0 0.0
    %122 = vmatpush.msra.mxu0 0.0
    %123 = vmatpush.msra.mxu0 0.0
    %124 = vmatpush.msra.mxu0 0.0
    %125 = vmatpush.msra.mxu0 0.0
    %126 = vmatpush.msra.mxu0 0.0
    %127 = vmatpush.msra.mxu0 0.0
    %128 = vmatpush.msra.mxu0 0.0
    %129 = vmatpush.msra.mxu0 0.0
    %130 = vmatpush.msra.mxu0 0.0
    %131 = vmatpush.msra.mxu0 0.0
    %132 = vmatpush.msra.mxu0 %v115
    %133 = vmatpush.msra.mxu0 %v114
    %134 = vmatpush.msra.mxu0 %v113
    %135 = vmatpush.msra.mxu0 %v112
    %136 = vmatmul.f32.gmra.mxu0 %v118
    %v137 = vpop.f32.mrf.mxu0
    %v138 = vadd.f32 0.0, %v137
    %139 = vdwg.mxu0
    %v140 = vld [vmem:[%s5] sm:$0x1]
    %v141 = vld [vmem:[%s6] sm:$0x1]
    %142 = vadd.xlane.f32.xlu0 %v138
    %v143 = vpop.xlane.xlu0 %142
    %v144 = vrcp.pop 128.0
    %v145 = vmul.f32 128.0, %v144
    %v146 = vsub.f32 1.0, %v145
    %v147 = vmul.f32 %v144, %v146
    %v148 = vadd.f32 %v144, %v147
    %vm149 = vweird.f32 %v144
    %v150 = vsel %vm149, %v144, %v148
    %v151 = vmul.f32 %v143, %v150
    %v152 = vmul.f32 %v138, %v138
    %153 = vadd.xlane.f32.xlu0 %v152
    %v154 = vpop.xlane.xlu0 %153
    %v155 = vmul.f32 %v154, %v150
    %v156 = vmul.f32 %v151, %v151
    %v157 = vsub.f32 %v155, %v156
    %v158 = vmax.f32 %v157, 0.0
    %v159 = vsub.f32 %v138, %v151
    %v160 = vadd.f32 %v158, 1e-05
    %v161 = vrsqrt.pop %v160
    %v162 = vmul.f32 %v161, %v160
    %v163 = vmul.f32 %v162, %v161
    %v164 = vmul.f32 0.5, %v163
    %v165 = vsub.f32 1.5, %v164
    %v166 = vmul.f32 %v161, %v165
    %vm167 = vweird.f32 %v160
    %vm168 = vweird.f32 %v161
    %vm169 = vmor %vm167, %vm168
    %v170 = vsel %vm169, %v161, %v166
    %v171 = vmul.f32 %v159, %v170
    %v173 = vperm.slane %v140, 0
    %v175 = vmul.f32 %v171, %v173
    %v177 = vperm.slane %v141, 0
    %v179 = vadd.f32 %v175, %v177
    %v180 = vld [vmem:[#allocation5] sm:$0xff]
    %v181 = vld [vmem:[#allocation7] sm:$0xff]
    %v182 = vld [vmem:[#allocation10] sm:$0xff]
    %v183 = vld [vmem:[#allocation10 + $0x8] sm:$0xff]
    %v184 = vld [vmem:[#allocation10 + $0x10] sm:$0xff]
    %v185 = vld [vmem:[#allocation10 + $0x18] sm:$0xff]
    %v186 = vld [vmem:[%s7] sm:$0x1]
    %v187 = vld [vmem:[%s8] sm:$0x1]
    %v188 = vld [vmem:[%s9] sm:$0x1]
    %v189 = vld [vmem:[%s10] sm:$0x1]
    %v191 = vsel %vm116, %v180, 0
    %193 = vmatpush.msra.mxu0 0.0
    %194 = vmatpush.msra.mxu0 0.0
    %195 = vmatpush.msra.mxu0 0.0
    %196 = vmatpush.msra.mxu0 0.0
    %197 = vmatpush.msra.mxu0 0.0
    %198 = vmatpush.msra.mxu0 0.0
    %199 = vmatpush.msra.mxu0 0.0
    %200 = vmatpush.msra.mxu0 0.0
    %201 = vmatpush.msra.mxu0 0.0
    %202 = vmatpush.msra.mxu0 0.0
    %203 = vmatpush.msra.mxu0 0.0
    %204 = vmatpush.msra.mxu0 0.0
    %205 = vmatpush.msra.mxu0 %v185
    %206 = vmatpush.msra.mxu0 %v184
    %207 = vmatpush.msra.mxu0 %v183
    %208 = vmatpush.msra.mxu0 %v182
    %209 = vmatmul.f32.gmra.mxu0 %v191
    %v210 = vpop.f32.mrf.mxu0
    %v211 = vadd.f32 0.0, %v210
    %212 = vdwg.mxu0
    %213 = vadd.xlane.f32.xlu0 %v211
    %v214 = vpop.xlane.xlu0 %213
    %v215 = vmul.f32 %v214, %v150
    %v216 = vmul.f32 %v211, %v211
    %217 = vadd.xlane.f32.xlu0 %v216
    %v218 = vpop.xlane.xlu0 %217
    %v219 = vmul.f32 %v218, %v150
    %v220 = vmul.f32 %v215, %v215
    %v221 = vsub.f32 %v219, %v220
    %v222 = vmax.f32 %v221, 0.0
    %v223 = vsub.f32 %v211, %v215
    %v224 = vadd.f32 %v222, 1e-05
    %v225 = vrsqrt.pop %v224
    %v226 = vmul.f32 %v225, %v224
    %v227 = vmul.f32 %v226, %v225
    %v228 = vmul.f32 0.5, %v227
    %v229 = vsub.f32 1.5, %v228
    %v230 = vmul.f32 %v225, %v229
    %vm231 = vweird.f32 %v224
    %vm232 = vweird.f32 %v225
    %vm233 = vmor %vm231, %vm232
    %v234 = vsel %vm233, %v225, %v230
    %v235 = vmul.f32 %v223, %v234
    %v237 = vperm.slane %v186, 0
    %v239 = vmul.f32 %v235, %v237
    %v241 = vperm.slane %v187, 0
    %v243 = vadd.f32 %v239, %v241
    %v244 = vadd.f32 %v179, %v243
    %v245 = vlaneseq
    %v246 = vand.u32 %v245, 127
    %vm247 = vcmp.ge.s32.totalorder %v246, 64
    %vm248 = vcmp.lt.s32.totalorder %v246, 96
    %vm249 = vmand %vm247, %vm248
    %v250 = vtanh.pop %v244
    %v251 = vxor.u32 %v244, 2147483648
    %v252 = vmul.f32 %v251, 1.442695
    %v253 = vpow.pop %v252
    %v254 = vadd.f32 %v253, 1.0
    %v255 = vrcp.pop %v254
    %v256 = vmul.f32 %v254, %v255
    %v257 = vsub.f32 1.0, %v256
    %v258 = vmul.f32 %v255, %v257
    %v259 = vadd.f32 %v255, %v258
    %vm260 = vweird.f32 %v254
    %vm261 = vweird.f32 %v255
    %vm262 = vmor %vm260, %vm261
    %v263 = vsel %vm262, %v255, %v259
    %v264 = vand.u32 2147483647, %v254
    %vm265 = vcmp.eq.f32.partialorder %v264, 8.507059e+37
    %v266 = vand.u32 %v254, 2147483648
    %v267 = vor.u32 1.1754944e-38, %v266
    %v268 = vsel %vm265, %v267, %v263
    %v269 = vmul.f32 1.0, %v268
    %v270 = vsel %vm249, %v250, %v269
    %272 = vrot.lane.b32.xlu0 %v181, 32
    %v273 = vpop.permute.xlu0 %272
    %v275 = vmul.f32 %v270, %v273
    %277 = vrot.lane.b32.xlu0 %v270, 64
    %v278 = vpop.permute.xlu0 %277
    %v280 = vmul.f32 %v270, %v278
    %282 = vrot.lane.b32.xlu0 %v280, 32
    %v283 = vpop.permute.xlu0 %282
    %v285 = vadd.f32 %v275, %v283
    %287 = vrot.lane.b32.xlu0 %v285, 96
    %v288 = vpop.permute.xlu0 %287
    %v290 = vsel %vm116, %v288, 0.0
    %291 = vadd.xlane.f32.xlu0 %v290
    %v292 = vpop.xlane.xlu0 %291
    %v293 = vrcp.pop 32.0
    %v294 = vmul.f32 32.0, %v293
    %v295 = vsub.f32 1.0, %v294
    %v296 = vmul.f32 %v293, %v295
    %v297 = vadd.f32 %v293, %v296
    %vm298 = vweird.f32 %v293
    %v299 = vsel %vm298, %v293, %v297
    %v300 = vmul.f32 %v292, %v299
    %v301 = vmul.f32 %v285, %v285
    %303 = vrot.lane.b32.xlu0 %v301, 96
    %v304 = vpop.permute.xlu0 %303
    %v306 = vsel %vm116, %v304, 0.0
    %307 = vadd.xlane.f32.xlu0 %v306
    %v308 = vpop.xlane.xlu0 %307
    %v309 = vmul.f32 %v308, %v299
    %v310 = vmul.f32 %v300, %v300
    %v311 = vsub.f32 %v309, %v310
    %v312 = vmax.f32 %v311, 0.0
    %v313 = vsub.f32 %v285, %v300
    %v314 = vadd.f32 %v312, 1e-05
    %v315 = vrsqrt.pop %v314
    %v316 = vmul.f32 %v315, %v314
    %v317 = vmul.f32 %v316, %v315
    %v318 = vmul.f32 0.5, %v317
    %v319 = vsub.f32 1.5, %v318
    %v320 = vmul.f32 %v315, %v319
    %vm321 = vweird.f32 %v314
    %vm322 = vweird.f32 %v315
    %vm323 = vmor %vm321, %vm322
    %v324 = vsel %vm323, %v315, %v320
    %v325 = vmul.f32 %v313, %v324
    %v327 = vperm.slane %v188, 0
    %328 = vrot.lane.b32.xlu0 %v327, 32
    %v329 = vpop.permute.xlu0 %328
    %v331 = vmul.f32 %v325, %v329
    %v333 = vperm.slane %v189, 0
    %334 = vrot.lane.b32.xlu0 %v333, 32
    %v335 = vpop.permute.xlu0 %334
    %v337 = vadd.f32 %v331, %v335
    %v338 = vtanh.pop %v337
    %340 = vrot.lane.b32.xlu0 %v338, 64
    %v341 = vpop.permute.xlu0 %340
    %v343 = vmul.f32 %v270, %v341
    %345 = vrot.lane.b32.xlu0 %v343, 32
    %v346 = vpop.permute.xlu0 %345
    %348 = vst.msk [vmem:[#allocation11] sm:$0xff] %vm116, %v346
    %vm349 = vcmask 523520
    %350 = vst.msk [vmem:[#allocation11] sm:$0xff] %vm349, %v337
    // Predicated region
    $region66: #{tpu_custom_call.1} parent=1 // pred_check
      _
    $region67: #{tpu_custom_call.1} parent=1 // pred_check_branch
      %352 = sbr.rel (0) target = $region69
    $region68: #{tpu_custom_call.1} parent=1 // pred_region
      %354 = vsyncadd [#allocation4], 0
      %s356 = sshll.u32 [#allocation11], 4
      %s357 = int_to_ptr.vmem [resolvable:$true] %s356
      %s358 = sshll.u32 %s11, 4
      %s359 = int_to_ptr.hbm [resolvable:$true] %s358
      %361 = dma.vmem_to_hbm [thread:$0]  %s357, 128, %s359, [#allocation4]
    $region69: #{tpu_custom_call.1} parent=1 // pred_fallthru
      _
    // Predicated region
    $region70: #{tpu_custom_call.1} parent=1 // pred_check
      _
    $region71: #{tpu_custom_call.1} parent=1 // pred_check_branch
      %363 = sbr.rel (0) target = $region73
    $region72: #{tpu_custom_call.1} parent=1 // pred_region
      %365 = dma.done [#allocation4], 128
    $region73: #{tpu_custom_call.1} parent=1 // pred_fallthru
      _
    %366 = vsyncpa [#allocation3], 1
    %367 = vsyncpa [#allocation6], 1
    %368 = vsyncpa [#allocation9], 1
    %369 = vsyncpa [#allocation4], 1

</llo_original>
